<compile_context>
chip_gen: v7x
topology: tpu7x:2x2x1
jax: 0.10.0
libtpu: 0.0.40
codegen_flags: <defaults>
</compile_context>

<pallas_src>
import numpy as np

import jax
import jax.numpy as jnp
from jax import lax
from jax.experimental import pallas as pl
from jax.experimental.pallas import tpu as pltpu


def _tap_shifts(H, W, K, NHW):
    """Static roll shifts for each (kh, kw) tap on the flattened (N*H*W) axis."""
    P = (K - 1) // 2
    shifts = []
    for kh in range(K):
        for kw in range(K):
            d = (kh - P) * W + (kw - P)
            shifts.append((-d) % NHW)          # result[q] = v[(q + d) mod NHW]
    return shifts


def _tap_masks(N, C, H, W, K):
    """(K*K*C + 1, N*H*W) f32 validity masks (broadcast over C); last row = ones
    (multiplies the constant bias row)."""
    P = (K - 1) // 2
    HW = H * W
    p = np.arange(N * HW) % HW
    row, col = p // W, p % W
    blocks = []
    for kh in range(K):
        for kw in range(K):
            dh, dw = kh - P, kw - P
            valid = np.ones(N * HW, dtype=bool)
            if dh > 0:
                valid &= row < H - dh
            elif dh < 0:
                valid &= row >= -dh
            if dw > 0:
                valid &= col < W - dw
            elif dw < 0:
                valid &= col >= -dw
            blocks.append(np.broadcast_to(valid, (C, N * HW)))
    blocks.append(np.ones((1, N * HW), dtype=bool))
    return np.concatenate(blocks, axis=0).astype(np.float32)


def _make_kernel(C, NHW, shifts):
    def kernel(x_ref, w_ref, m_ref, o_ref):
        # x_ref: (C, NHW)   w_ref: (2, C, K*K*C+1)   m_ref: (K*K*C+1, NHW)
        # o_ref: (C, NHW)
        x = x_ref[...].astype(jnp.float32)
        mask = m_ref[...]
        ones_row = jnp.ones((1, NHW), jnp.float32)

        def conv_bias(v, w_mat):
            # Stacked im2col RHS: 9 rolled copies of v (each (C, NHW)) plus a
            # constant-ones row for the bias; border/wrap invalidation + bias
            # gating are a single vmul with the precomputed mask.
            rows = [pltpu.roll(v, s, axis=1) if s else v for s in shifts]
            rows.append(ones_row)
            stacked = jnp.concatenate(rows, axis=0) * mask      # (K*K*C+1, NHW)
            return jnp.dot(w_mat, stacked,
                           preferred_element_type=jnp.float32)  # (C, NHW)

        h = conv_bias(jnp.maximum(x, 0.0), w_ref[0])   # relu -> conv1 + b1
        h = jnp.maximum(h, 0.0)                        # relu
        y = conv_bias(h, w_ref[1])                     # conv2 + b2
        o_ref[...] = (x + y).astype(o_ref.dtype)       # residual add

    return kernel


@jax.jit
def residual_block_nchw(x, w1, b1, w2, b2):
    """x: (N, C, H, W).  w1, w2: (K, K, C, C) in HWIO layout (PyTorch OIHW
    weights: transpose (2, 3, 1, 0) first).  b1, b2: (C,).
    Returns (N, C, H, W) = x + conv2(relu(conv1(relu(x))))."""
    N, Cin, H, W = x.shape
    K = w1.shape[0]
    Cout = w1.shape[3]
    assert Cin == Cout, "residual add requires in_channels == out_channels"
    C = Cin
    NHW = N * H * W

    # Lane-dense layout: (N, C, H, W) -> (C, N*H*W).
    x_flat = jnp.transpose(x, (1, 0, 2, 3)).reshape(C, NHW)

    # One-time weight+bias pack: HWIO -> (Cout, K*K*C | bias) per conv,
    # stacked into a single (2, Cout, K*K*C+1) array.
    w1m = jnp.transpose(w1, (3, 0, 1, 2)).reshape(C, K * K * C)
    w2m = jnp.transpose(w2, (3, 0, 1, 2)).reshape(C, K * K * C)
    w_packed = jnp.stack(
        [jnp.concatenate([w1m, b1.reshape(C, 1)], axis=1),
         jnp.concatenate([w2m, b2.reshape(C, 1)], axis=1)], axis=0
    ).astype(jnp.float32)                                   # (2, C, K*K*C+1)

    # Host-precomputed border masks (+ bias ones-row), constant-folded by XLA.
    mask = jnp.asarray(_tap_masks(N, C, H, W, K))           # (K*K*C+1, NHW)

    shifts = _tap_shifts(H, W, K, NHW)
    kernel = _make_kernel(C, NHW, shifts)

    grid_spec = pltpu.PrefetchScalarGridSpec(
        num_scalar_prefetch=0,
        grid=(1,),   # single step: whole (C, N*H*W) problem fits trivially in VMEM
        in_specs=[
            pl.BlockSpec((C, NHW), lambda i: (0, 0)),
            pl.BlockSpec((2, C, K * K * C + 1), lambda i: (0, 0, 0)),
            pl.BlockSpec((K * K * C + 1, NHW), lambda i: (0, 0)),
        ],
        out_specs=pl.BlockSpec((C, NHW), lambda i: (0, 0)),
    )

    y_flat = pl.pallas_call(
        kernel,
        out_shape=jax.ShapeDtypeStruct((C, NHW), x.dtype),
        grid_spec=grid_spec,
        compiler_params=pltpu.CompilerParams(
            dimension_semantics=("arbitrary",)),
    )(x_flat, w_packed, mask)

    return jnp.transpose(y_flat.reshape(C, N, H, W), (1, 0, 2, 3))


def _reference_nchw(x_nchw, w1, b1, w2, b2):
    """Pure-JAX reference (lax.conv) for correctness checking."""
    dn = ("NHWC", "HWIO", "NHWC")
    x = jnp.transpose(x_nchw, (0, 2, 3, 1))
    h = jax.nn.relu(x)
    h = lax.conv_general_dilated(h, w1, (1, 1), "SAME", dimension_numbers=dn) + b1
    h = jax.nn.relu(h)
    h = lax.conv_general_dilated(h, w2, (1, 1), "SAME", dimension_numbers=dn) + b2
    return jnp.transpose(x + h, (0, 3, 1, 2))


if __name__ == "__main__":
    # ResidualBlock(in_channels=4, out_channels=4, kernel_size=3)
    N, C, H, W, K = 2, 4, 16, 16, 3

    key = jax.random.PRNGKey(0)
    kx, k1, kb1, k2, kb2 = jax.random.split(key, 5)

    x_nchw = jax.random.normal(kx, (N, C, H, W), dtype=jnp.float32)

    # Deterministic parameter init (Kaiming-uniform-ish bound, like nn.Conv2d).
    fan_in = C * K * K
    bound = 1.0 / np.sqrt(fan_in)
    w1 = jax.random.uniform(k1, (K, K, C, C), jnp.float32, -bound, bound)   # HWIO
    b1 = jax.random.uniform(kb1, (C,), jnp.float32, -bound, bound)
    w2 = jax.random.uniform(k2, (K, K, C, C), jnp.float32, -bound, bound)   # HWIO
    b2 = jax.random.uniform(kb2, (C,), jnp.float32, -bound, bound)

    y = jax.block_until_ready(residual_block_nchw(x_nchw, w1, b1, w2, b2))

    y_ref = _reference_nchw(x_nchw, w1, b1, w2, b2)
    np.testing.assert_allclose(np.asarray(y), np.asarray(y_ref),
                               rtol=1e-4, atol=1e-4)

    print("KERNEL_OK")
</pallas_src>

<mosaic_0001>
module attributes {stable_mosaic.version = 11 : i64} {
  func.func @kernel(%arg0: i32, %arg1: memref<4x512xf32, #tpu.memory_space<vmem>>, %arg2: memref<2x4x37xf32, #tpu.memory_space<vmem>>, %arg3: memref<37x512xf32, #tpu.memory_space<vmem>>, %arg4: memref<4x512xf32, #tpu.memory_space<vmem>>) attributes {dimension_semantics = [#tpu.dimension_semantics<arbitrary>], iteration_bounds = array<i64: 1>, scalar_prefetch = 0 : i64, scratch_operands = 0 : i64, tpu.core_type = #tpu.core_type<tc>, window_params = [{pipeline_mode = #tpu.pipeline_mode<synchronous>, transform_indices = @transform_0, window_bounds = array<i64: 4, 512>}, {pipeline_mode = #tpu.pipeline_mode<synchronous>, transform_indices = @transform_1, window_bounds = array<i64: 2, 4, 37>}, {pipeline_mode = #tpu.pipeline_mode<synchronous>, transform_indices = @transform_2, window_bounds = array<i64: 37, 512>}, {pipeline_mode = #tpu.pipeline_mode<synchronous>, transform_indices = @transform_3, window_bounds = array<i64: 4, 512>}]} {
    %c0 = arith.constant 0 : index
    %c0_0 = arith.constant 0 : index
    %0 = vector.load %arg1[%c0, %c0_0] : memref<4x512xf32, #tpu.memory_space<vmem>>, vector<4x512xf32>
    %c0_1 = arith.constant 0 : index
    %c0_2 = arith.constant 0 : index
    %1 = vector.load %arg3[%c0_1, %c0_2] : memref<37x512xf32, #tpu.memory_space<vmem>>, vector<37x512xf32>
    %cst = arith.constant 1.000000e+00 : f32
    %2 = vector.broadcast %cst : f32 to vector<1x512xf32>
    %cst_3 = arith.constant 0.000000e+00 : f32
    %3 = vector.broadcast %cst_3 : f32 to vector<4x512xf32>
    %4 = arith.maximumf %0, %3 : vector<4x512xf32>
    %c0_4 = arith.constant 0 : index
    %c0_5 = arith.constant 0 : index
    %c0_6 = arith.constant 0 : index
    %5 = vector.load %arg2[%c0_4, %c0_5, %c0_6] : memref<2x4x37xf32, #tpu.memory_space<vmem>>, vector<1x4x37xf32>
    %6 = vector.shape_cast %5 : vector<1x4x37xf32> to vector<4x37xf32>
    %c17_i32 = arith.constant 17 : i32
    %7 = tpu.dynamic_rotate %4 by %c17_i32 dim 1 : vector<4x512xf32>, i32 -> vector<4x512xf32>
    %c16_i32 = arith.constant 16 : i32
    %8 = tpu.dynamic_rotate %4 by %c16_i32 dim 1 : vector<4x512xf32>, i32 -> vector<4x512xf32>
    %c15_i32 = arith.constant 15 : i32
    %9 = tpu.dynamic_rotate %4 by %c15_i32 dim 1 : vector<4x512xf32>, i32 -> vector<4x512xf32>
    %c1_i32 = arith.constant 1 : i32
    %10 = tpu.dynamic_rotate %4 by %c1_i32 dim 1 : vector<4x512xf32>, i32 -> vector<4x512xf32>
    %c511_i32 = arith.constant 511 : i32
    %11 = tpu.dynamic_rotate %4 by %c511_i32 dim 1 : vector<4x512xf32>, i32 -> vector<4x512xf32>
    %c497_i32 = arith.constant 497 : i32
    %12 = tpu.dynamic_rotate %4 by %c497_i32 dim 1 : vector<4x512xf32>, i32 -> vector<4x512xf32>
    %c496_i32 = arith.constant 496 : i32
    %13 = tpu.dynamic_rotate %4 by %c496_i32 dim 1 : vector<4x512xf32>, i32 -> vector<4x512xf32>
    %c495_i32 = arith.constant 495 : i32
    %14 = tpu.dynamic_rotate %4 by %c495_i32 dim 1 : vector<4x512xf32>, i32 -> vector<4x512xf32>
    %15 = tpu.concatenate %7, %8, %9, %10, %4, %11, %12, %13, %14, %2 in 0 : vector<4x512xf32>, vector<4x512xf32>, vector<4x512xf32>, vector<4x512xf32>, vector<4x512xf32>, vector<4x512xf32>, vector<4x512xf32>, vector<4x512xf32>, vector<4x512xf32>, vector<1x512xf32> -> vector<37x512xf32>
    %16 = arith.mulf %15, %1 : vector<37x512xf32>
    %cst_7 = arith.constant dense<0.000000e+00> : vector<4x512xf32>
    %17 = tpu.matmul %6, %16, %cst_7 {dimension_numbers = #tpu.dot_dimension_numbers<[1], [0], [0], [1], [0, 0, 1, 1], [], []>} : vector<4x37xf32>, vector<37x512xf32>, vector<4x512xf32> -> vector<4x512xf32>
    %cst_8 = arith.constant 0.000000e+00 : f32
    %18 = vector.broadcast %cst_8 : f32 to vector<4x512xf32>
    %19 = arith.maximumf %17, %18 : vector<4x512xf32>
    %c1 = arith.constant 1 : index
    %c0_9 = arith.constant 0 : index
    %c0_10 = arith.constant 0 : index
    %20 = vector.load %arg2[%c1, %c0_9, %c0_10] : memref<2x4x37xf32, #tpu.memory_space<vmem>>, vector<1x4x37xf32>
    %21 = vector.shape_cast %20 : vector<1x4x37xf32> to vector<4x37xf32>
    %c17_i32_11 = arith.constant 17 : i32
    %22 = tpu.dynamic_rotate %19 by %c17_i32_11 dim 1 : vector<4x512xf32>, i32 -> vector<4x512xf32>
    %c16_i32_12 = arith.constant 16 : i32
    %23 = tpu.dynamic_rotate %19 by %c16_i32_12 dim 1 : vector<4x512xf32>, i32 -> vector<4x512xf32>
    %c15_i32_13 = arith.constant 15 : i32
    %24 = tpu.dynamic_rotate %19 by %c15_i32_13 dim 1 : vector<4x512xf32>, i32 -> vector<4x512xf32>
    %c1_i32_14 = arith.constant 1 : i32
    %25 = tpu.dynamic_rotate %19 by %c1_i32_14 dim 1 : vector<4x512xf32>, i32 -> vector<4x512xf32>
    %c511_i32_15 = arith.constant 511 : i32
    %26 = tpu.dynamic_rotate %19 by %c511_i32_15 dim 1 : vector<4x512xf32>, i32 -> vector<4x512xf32>
    %c497_i32_16 = arith.constant 497 : i32
    %27 = tpu.dynamic_rotate %19 by %c497_i32_16 dim 1 : vector<4x512xf32>, i32 -> vector<4x512xf32>
    %c496_i32_17 = arith.constant 496 : i32
    %28 = tpu.dynamic_rotate %19 by %c496_i32_17 dim 1 : vector<4x512xf32>, i32 -> vector<4x512xf32>
    %c495_i32_18 = arith.constant 495 : i32
    %29 = tpu.dynamic_rotate %19 by %c495_i32_18 dim 1 : vector<4x512xf32>, i32 -> vector<4x512xf32>
    %30 = tpu.concatenate %22, %23, %24, %25, %19, %26, %27, %28, %29, %2 in 0 : vector<4x512xf32>, vector<4x512xf32>, vector<4x512xf32>, vector<4x512xf32>, vector<4x512xf32>, vector<4x512xf32>, vector<4x512xf32>, vector<4x512xf32>, vector<4x512xf32>, vector<1x512xf32> -> vector<37x512xf32>
    %31 = arith.mulf %30, %1 : vector<37x512xf32>
    %cst_19 = arith.constant dense<0.000000e+00> : vector<4x512xf32>
    %32 = tpu.matmul %21, %31, %cst_19 {dimension_numbers = #tpu.dot_dimension_numbers<[1], [0], [0], [1], [0, 0, 1, 1], [], []>} : vector<4x37xf32>, vector<37x512xf32>, vector<4x512xf32> -> vector<4x512xf32>
    %33 = arith.addf %0, %32 : vector<4x512xf32>
    %c0_20 = arith.constant 0 : index
    %c0_21 = arith.constant 0 : index
    %34 = vector.load %arg4[%c0_20, %c0_21] : memref<4x512xf32, #tpu.memory_space<vmem>>, vector<4x512xf32>
    tpu.vector_store %arg4[%c0_20, %c0_21], %33 {strides = array<i32>} : memref<4x512xf32, #tpu.memory_space<vmem>>, vector<4x512xf32>,
    return
  }
  func.func @transform_0(%arg0: i32) -> (i32, i32) {
    %c0_i32 = arith.constant 0 : i32
    %c0_i32_0 = arith.constant 0 : i32
    %c0_i32_1 = arith.constant 0 : i32
    return %c0_i32, %c0_i32_0 : i32, i32
  }
  func.func @transform_1(%arg0: i32) -> (i32, i32, i32) {
    %c0_i32 = arith.constant 0 : i32
    %c0_i32_0 = arith.constant 0 : i32
    %c0_i32_1 = arith.constant 0 : i32
    %c0_i32_2 = arith.constant 0 : i32
    return %c0_i32, %c0_i32_0, %c0_i32_1 : i32, i32, i32
  }
  func.func @transform_2(%arg0: i32) -> (i32, i32) {
    %c0_i32 = arith.constant 0 : i32
    %c0_i32_0 = arith.constant 0 : i32
    %c0_i32_1 = arith.constant 0 : i32
    return %c0_i32, %c0_i32_0 : i32, i32
  }
  func.func @transform_3(%arg0: i32) -> (i32, i32) {
    %c0_i32 = arith.constant 0 : i32
    %c0_i32_0 = arith.constant 0 : i32
    %c0_i32_1 = arith.constant 0 : i32
    return %c0_i32, %c0_i32_0 : i32, i32
  }
}

</mosaic_0001>

<llo_original>
// kernel: residual_block_nchw.1
$region0: #{residual_block_nchw.1}
  #allocation0 [shape = 'u32[]', space=smem, size = 0x4, offset = 0x4, fixed_abs, tag = 'smem constant byte address 0x4 - core index']
  #allocation1 [shape = 'u32[144,128]{1,0:T(1,128)}', space=vmem, size = 0x12000, scoped, tag = 'internal scratch']
  %s0 = inlined_call_operand.vmem [shape: f32[4,512], index: 0, kind: input, shape index: {}]
  %s1 = inlined_call_operand.vmem [shape: f32[2,4,37], index: 1, kind: input, shape index: {}]
  %s2 = inlined_call_operand.vmem [shape: f32[37,512], index: 2, kind: input, shape index: {}]
  %s3 = inlined_call_operand.vmem [shape: f32[4,512], index: 3, kind: output, shape index: {}]
  %s4 = sld [smem:[#allocation0]]
  $region22: #{residual_block_nchw.1} parent=0
    _
  %s6 = ssub.s32 1, %s4
  %s7 = scalar_select 0, %s6, %s4
  // Predicated region
  $region2: #{residual_block_nchw.1} parent=0 // pred_check
    _
  $region3: #{residual_block_nchw.1} parent=0 // pred_check_branch
    %9 = sbr.rel (0) target = $region5
  $region4: #{residual_block_nchw.1} parent=0 // pred_region
    _
  $region5: #{residual_block_nchw.1} parent=0 // pred_fallthru
    _
  // Predicated region
  $region6: #{residual_block_nchw.1} parent=0 // pred_check
    _
  $region7: #{residual_block_nchw.1} parent=0 // pred_check_branch
    %11 = sbr.rel (0) target = $region9
  $region8: #{residual_block_nchw.1} parent=0 // pred_region
    _
  $region9: #{residual_block_nchw.1} parent=0 // pred_fallthru
    _
  // Predicated region
  $region10: #{residual_block_nchw.1} parent=0 // pred_check
    _
  $region11: #{residual_block_nchw.1} parent=0 // pred_check_branch
    %13 = sbr.rel (0) target = $region13
  $region12: #{residual_block_nchw.1} parent=0 // pred_region
    _
  $region13: #{residual_block_nchw.1} parent=0 // pred_fallthru
    _
  %v14 = vld [vmem:[%s0] sm:$0xff]
  %v15 = vld [vmem:[%s0 + $0x8] sm:$0xff]
  %v16 = vld [vmem:[%s2] sm:$0xff]
  %v17 = vld [vmem:[%s2 + $0x8] sm:$0xff]
  %v18 = vld [vmem:[%s2 + $0x10] sm:$0xff]
  %v19 = vld [vmem:[%s2 + $0x18] sm:$0xff]
  %v20 = vld [vmem:[%s2 + $0x20] sm:$0xff]
  %v21 = vld [vmem:[%s2 + $0x28] sm:$0xff]
  %v22 = vld [vmem:[%s2 + $0x30] sm:$0xff]
  %v23 = vld [vmem:[%s2 + $0x38] sm:$0xff]
  %v24 = vld [vmem:[%s2 + $0x40] sm:$0xff]
  %v25 = vld [vmem:[%s2 + $0x48] sm:$0xff]
  %v26 = vld [vmem:[%s2 + $0x50] sm:$0xff]
  %v27 = vld [vmem:[%s2 + $0x58] sm:$0xff]
  %v28 = vld [vmem:[%s2 + $0x60] sm:$0xff]
  %v29 = vld [vmem:[%s2 + $0x68] sm:$0xff]
  %v30 = vld [vmem:[%s2 + $0x70] sm:$0xff]
  %v31 = vld [vmem:[%s2 + $0x78] sm:$0xff]
  %v32 = vld [vmem:[%s2 + $0x80] sm:$0x1f]
  %v33 = vld [vmem:[%s2 + $0x88] sm:$0x1f]
  %v34 = vld [vmem:[%s2 + $0x90] sm:$0x1f]
  %v35 = vld [vmem:[%s2 + $0x98] sm:$0x1f]
  %v36 = vmax.f32 %v14, 0.0
  %v37 = vmax.f32 %v15, 0.0
  %v38 = vld [vmem:[%s1] sm:$0xf]
  %v41 = vcombine.high %v36, %v36
  %v42 = vcombine.high %v37, %v37
  %45 = vrot.lane.b32.xlu0 %v36, 17
  %v46 = vpop.permute.xlu0 %45
  %47 = vrot.lane.b32.xlu0 %v41, 17
  %v48 = vpop.permute.xlu0 %47
  %49 = vrot.lane.b32.xlu0 %v37, 17
  %v50 = vpop.permute.xlu0 %49
  %51 = vrot.lane.b32.xlu0 %v42, 17
  %v52 = vpop.permute.xlu0 %51
  %v53 = vlaneseq
  %v54 = vand.u32 %v53, 127
  %vm55 = vcmp.lt.s32.totalorder %v54, 17
  %v56 = vsel %vm55, %v50, %v52
  %v57 = vsel %vm55, %v48, %v50
  %v58 = vsel %vm55, %v46, %v48
  %v59 = vsel %vm55, %v52, %v46
  %60 = vrot.lane.b32.xlu0 %v36, 16
  %v61 = vpop.permute.xlu0 %60
  %62 = vrot.lane.b32.xlu0 %v41, 16
  %v63 = vpop.permute.xlu0 %62
  %64 = vrot.lane.b32.xlu0 %v37, 16
  %v65 = vpop.permute.xlu0 %64
  %66 = vrot.lane.b32.xlu0 %v42, 16
  %v67 = vpop.permute.xlu0 %66
  %vm68 = vcmp.lt.s32.totalorder %v54, 16
  %v69 = vsel %vm68, %v65, %v67
  %v70 = vsel %vm68, %v63, %v65
  %v71 = vsel %vm68, %v61, %v63
  %v72 = vsel %vm68, %v67, %v61
  %73 = vrot.lane.b32.xlu0 %v36, 15
  %v74 = vpop.permute.xlu0 %73
  %75 = vrot.lane.b32.xlu0 %v41, 15
  %v76 = vpop.permute.xlu0 %75
  %77 = vrot.lane.b32.xlu0 %v37, 15
  %v78 = vpop.permute.xlu0 %77
  %79 = vrot.lane.b32.xlu0 %v42, 15
  %v80 = vpop.permute.xlu0 %79
  %vm81 = vcmp.lt.s32.totalorder %v54, 15
  %v82 = vsel %vm81, %v78, %v80
  %v83 = vsel %vm81, %v76, %v78
  %v84 = vsel %vm81, %v74, %v76
  %v85 = vsel %vm81, %v80, %v74
  %86 = vrot.lane.b32.xlu0 %v36, 1
  %v87 = vpop.permute.xlu0 %86
  %88 = vrot.lane.b32.xlu0 %v41, 1
  %v89 = vpop.permute.xlu0 %88
  %90 = vrot.lane.b32.xlu0 %v37, 1
  %v91 = vpop.permute.xlu0 %90
  %92 = vrot.lane.b32.xlu0 %v42, 1
  %v93 = vpop.permute.xlu0 %92
  %vm94 = vcmp.lt.s32.totalorder %v54, 1
  %v95 = vsel %vm94, %v91, %v93
  %v96 = vsel %vm94, %v89, %v91
  %v97 = vsel %vm94, %v87, %v89
  %v98 = vsel %vm94, %v93, %v87
  %99 = vrot.lane.b32.xlu0 %v36, 127
  %v100 = vpop.permute.xlu0 %99
  %101 = vrot.lane.b32.xlu0 %v41, 127
  %v102 = vpop.permute.xlu0 %101
  %103 = vrot.lane.b32.xlu0 %v37, 127
  %v104 = vpop.permute.xlu0 %103
  %105 = vrot.lane.b32.xlu0 %v42, 127
  %v106 = vpop.permute.xlu0 %105
  %vm107 = vcmp.lt.s32.totalorder %v54, 127
  %v108 = vsel %vm107, %v104, %v106
  %v109 = vsel %vm107, %v102, %v104
  %v110 = vsel %vm107, %v100, %v102
  %v111 = vsel %vm107, %v106, %v100
  %112 = vrot.lane.b32.xlu0 %v36, 113
  %v113 = vpop.permute.xlu0 %112
  %114 = vrot.lane.b32.xlu0 %v41, 113
  %v115 = vpop.permute.xlu0 %114
  %116 = vrot.lane.b32.xlu0 %v37, 113
  %v117 = vpop.permute.xlu0 %116
  %118 = vrot.lane.b32.xlu0 %v42, 113
  %v119 = vpop.permute.xlu0 %118
  %vm120 = vcmp.lt.s32.totalorder %v54, 113
  %v121 = vsel %vm120, %v117, %v119
  %v122 = vsel %vm120, %v115, %v117
  %v123 = vsel %vm120, %v113, %v115
  %v124 = vsel %vm120, %v119, %v113
  %125 = vrot.lane.b32.xlu0 %v36, 112
  %v126 = vpop.permute.xlu0 %125
  %127 = vrot.lane.b32.xlu0 %v41, 112
  %v128 = vpop.permute.xlu0 %127
  %129 = vrot.lane.b32.xlu0 %v37, 112
  %v130 = vpop.permute.xlu0 %129
  %131 = vrot.lane.b32.xlu0 %v42, 112
  %v132 = vpop.permute.xlu0 %131
  %vm133 = vcmp.lt.s32.totalorder %v54, 112
  %v134 = vsel %vm133, %v130, %v132
  %v135 = vsel %vm133, %v128, %v130
  %v136 = vsel %vm133, %v126, %v128
  %v137 = vsel %vm133, %v132, %v126
  %138 = vrot.lane.b32.xlu0 %v36, 111
  %v139 = vpop.permute.xlu0 %138
  %140 = vrot.lane.b32.xlu0 %v41, 111
  %v141 = vpop.permute.xlu0 %140
  %142 = vrot.lane.b32.xlu0 %v37, 111
  %v143 = vpop.permute.xlu0 %142
  %144 = vrot.lane.b32.xlu0 %v42, 111
  %v145 = vpop.permute.xlu0 %144
  %vm146 = vcmp.lt.s32.totalorder %v54, 111
  %v147 = vsel %vm146, %v143, %v145
  %v148 = vsel %vm146, %v141, %v143
  %v149 = vsel %vm146, %v139, %v141
  %v150 = vsel %vm146, %v145, %v139
  %v155 = vrot.slane %v72, 4
  %v156 = vrot.slane %v71, 4
  %v157 = vrot.slane %v70, 4
  %v158 = vrot.slane %v69, 4
  %v167 = vrot.slane %v98, 4
  %v168 = vrot.slane %v97, 4
  %v169 = vrot.slane %v96, 4
  %v170 = vrot.slane %v95, 4
  %v179 = vrot.slane %v110, 4
  %v180 = vrot.slane %v109, 4
  %v181 = vrot.slane %v108, 4
  %v182 = vrot.slane %v111, 4
  %v191 = vrot.slane %v136, 4
  %v192 = vrot.slane %v135, 4
  %v193 = vrot.slane %v134, 4
  %v194 = vrot.slane %v137, 4
  %vm199 = vcmask 1043456
  %v200 = vsel %vm199, %v59, %v155
  %v201 = vsel %vm199, %v58, %v156
  %v202 = vsel %vm199, %v57, %v157
  %v203 = vsel %vm199, %v56, %v158
  %v204 = vsel %vm199, %v85, %v167
  %v205 = vsel %vm199, %v84, %v168
  %v206 = vsel %vm199, %v83, %v169
  %v207 = vsel %vm199, %v82, %v170
  %v208 = vsel %vm199, %v36, %v179
  %v209 = vsel %vm199, %v41, %v180
  %v210 = vsel %vm199, %v37, %v181
  %v211 = vsel %vm199, %v42, %v182
  %v212 = vsel %vm199, %v123, %v191
  %v213 = vsel %vm199, %v122, %v192
  %v214 = vsel %vm199, %v121, %v193
  %v215 = vsel %vm199, %v124, %v194
  %v216 = vsel %vm199, %v149, 1.0
  %v217 = vsel %vm199, %v148, 1.0
  %v218 = vsel %vm199, %v147, 1.0
  %v219 = vsel %vm199, %v150, 1.0
  %v220 = vmul.f32 %v200, %v16
  %v221 = vmul.f32 %v201, %v17
  %v222 = vmul.f32 %v202, %v18
  %v223 = vmul.f32 %v203, %v19
  %v224 = vmul.f32 %v204, %v20
  %v225 = vmul.f32 %v205, %v21
  %v226 = vmul.f32 %v206, %v22
  %v227 = vmul.f32 %v207, %v23
  %v228 = vmul.f32 %v208, %v24
  %v229 = vmul.f32 %v209, %v25
  %v230 = vmul.f32 %v210, %v26
  %v231 = vmul.f32 %v211, %v27
  %v232 = vmul.f32 %v212, %v28
  %v233 = vmul.f32 %v213, %v29
  %v234 = vmul.f32 %v214, %v30
  %v235 = vmul.f32 %v215, %v31
  %v236 = vmul.f32 %v216, %v32
  %v237 = vmul.f32 %v217, %v33
  %v238 = vmul.f32 %v218, %v34
  %v239 = vmul.f32 %v219, %v35
  %vm240 = vcmask 302080
  %v242 = vsel %vm240, %v38, 0
  %vm244 = vcmask 1044480
  %v246 = vsel %vm244, %v236, 0
  %v249 = vsel %vm244, %v237, 0
  %v252 = vsel %vm244, %v238, 0
  %v255 = vsel %vm244, %v239, 0
  %257 = vmatprep.subr.mxu0 %v221
  %258 = vmatpush1.msra.mxu0 %v220
  %259 = vmatprep.subr.mxu0 %v225
  %260 = vmatpush1.msra.mxu0 %v224
  %261 = vmatprep.subr.mxu0 %v229
  %262 = vmatpush1.msra.mxu0 %v228
  %263 = vmatprep.subr.mxu0 %v233
  %264 = vmatpush1.msra.mxu0 %v232
  %265 = vmatprep.subr.mxu0 %v249
  %266 = vmatpush1.msra.mxu0 %v246
  %267 = vmatprep.subr.mxu0 0.0
  %268 = vmatpush1.msra.mxu0 0.0
  %269 = vmatprep.subr.mxu0 0.0
  %270 = vmatpush1.msra.mxu0 0.0
  %271 = vmatprep.subr.mxu0 0.0
  %272 = vmatpush1.msra.mxu0 0.0
  %273 = vmatprep.subr.mxu0 0.0
  %274 = vmatpush1.msra.mxu0 0.0
  %275 = vmatprep.subr.mxu0 0.0
  %276 = vmatpush1.msra.mxu0 0.0
  %277 = vmatprep.subr.mxu0 0.0
  %278 = vmatpush1.msra.mxu0 0.0
  %279 = vmatprep.subr.mxu0 0.0
  %280 = vmatpush1.msra.mxu0 0.0
  %281 = vmatprep.subr.mxu0 0.0
  %282 = vmatpush1.msra.mxu0 0.0
  %283 = vmatprep.subr.mxu0 0.0
  %284 = vmatpush1.msra.mxu0 0.0
  %285 = vmatprep.subr.mxu0 0.0
  %286 = vmatpush1.msra.mxu0 0.0
  %287 = vmatprep.subr.mxu0 0.0
  %288 = vmatpush1.msra.mxu0 0.0
  %289 = vmatprep.subr.mxu0 0.0
  %290 = vmatpush1.msra.mxu0 0.0
  %291 = vmatprep.subr.mxu0 0.0
  %292 = vmatpush1.msra.mxu0 0.0
  %293 = vmatprep.subr.mxu0 0.0
  %294 = vmatpush1.msra.mxu0 0.0
  %295 = vmatprep.subr.mxu0 0.0
  %296 = vmatpush1.msra.mxu0 0.0
  %297 = vmatprep.subr.mxu0 0.0
  %298 = vmatpush1.msra.mxu0 0.0
  %299 = vmatprep.subr.mxu0 0.0
  %300 = vmatpush1.msra.mxu0 0.0
  %301 = vmatprep.subr.mxu0 0.0
  %302 = vmatpush1.msra.mxu0 0.0
  %303 = vmatprep.subr.mxu0 0.0
  %304 = vmatpush1.msra.mxu0 0.0
  %305 = vmatprep.subr.mxu0 0.0
  %306 = vmatpush1.msra.mxu0 0.0
  %307 = vmatprep.subr.mxu0 0.0
  %308 = vmatpush1.msra.mxu0 0.0
  %309 = vmatprep.subr.mxu0 0.0
  %310 = vmatpush1.msra.mxu0 0.0
  %311 = vmatprep.subr.mxu0 0.0
  %312 = vmatpush1.msra.mxu0 0.0
  %313 = vmatprep.subr.mxu0 0.0
  %314 = vmatpush1.msra.mxu0 0.0
  %315 = vmatprep.subr.mxu0 0.0
  %316 = vmatpush1.msra.mxu0 0.0
  %317 = vmatprep.subr.mxu0 0.0
  %318 = vmatpush1.msra.mxu0 0.0
  %319 = vmatprep.subr.mxu0 0.0
  %320 = vmatpush1.msra.mxu0 0.0
  %321 = vmatprep.mubr.f32.mxu0 0.0
  %322 = vmatmul.mubr.f32.gmra.mrb[0].mxu0 %v242
  %v323 = vpop.f32.mrb[0].mxu0
  %v324 = vadd.f32 0.0, %v323
  %v325 = vpop.f32.mrb[0].mxu0
  %v326 = vadd.f32 0.0, %v325
  %327 = vdwg.mxu0
  %328 = vmatprep.subr.mxu0 %v223
  %329 = vmatpush1.msra.mxu0 %v222
  %330 = vmatprep.subr.mxu0 %v227
  %331 = vmatpush1.msra.mxu0 %v226
  %332 = vmatprep.subr.mxu0 %v231
  %333 = vmatpush1.msra.mxu0 %v230
  %334 = vmatprep.subr.mxu0 %v235
  %335 = vmatpush1.msra.mxu0 %v234
  %336 = vmatprep.subr.mxu0 %v255
  %337 = vmatpush1.msra.mxu0 %v252
  %338 = vmatprep.subr.mxu0 0.0
  %339 = vmatpush1.msra.mxu0 0.0
  %340 = vmatprep.subr.mxu0 0.0
  %341 = vmatpush1.msra.mxu0 0.0
  %342 = vmatprep.subr.mxu0 0.0
  %343 = vmatpush1.msra.mxu0 0.0
  %344 = vmatprep.subr.mxu0 0.0
  %345 = vmatpush1.msra.mxu0 0.0
  %346 = vmatprep.subr.mxu0 0.0
  %347 = vmatpush1.msra.mxu0 0.0
  %348 = vmatprep.subr.mxu0 0.0
  %349 = vmatpush1.msra.mxu0 0.0
  %350 = vmatprep.subr.mxu0 0.0
  %351 = vmatpush1.msra.mxu0 0.0
  %352 = vmatprep.subr.mxu0 0.0
  %353 = vmatpush1.msra.mxu0 0.0
  %354 = vmatprep.subr.mxu0 0.0
  %355 = vmatpush1.msra.mxu0 0.0
  %356 = vmatprep.subr.mxu0 0.0
  %357 = vmatpush1.msra.mxu0 0.0
  %358 = vmatprep.subr.mxu0 0.0
  %359 = vmatpush1.msra.mxu0 0.0
  %360 = vmatprep.subr.mxu0 0.0
  %361 = vmatpush1.msra.mxu0 0.0
  %362 = vmatprep.subr.mxu0 0.0
  %363 = vmatpush1.msra.mxu0 0.0
  %364 = vmatprep.subr.mxu0 0.0
  %365 = vmatpush1.msra.mxu0 0.0
  %366 = vmatprep.subr.mxu0 0.0
  %367 = vmatpush1.msra.mxu0 0.0
  %368 = vmatprep.subr.mxu0 0.0
  %369 = vmatpush1.msra.mxu0 0.0
  %370 = vmatprep.subr.mxu0 0.0
  %371 = vmatpush1.msra.mxu0 0.0
  %372 = vmatprep.subr.mxu0 0.0
  %373 = vmatpush1.msra.mxu0 0.0
  %374 = vmatprep.subr.mxu0 0.0
  %375 = vmatpush1.msra.mxu0 0.0
  %376 = vmatprep.subr.mxu0 0.0
  %377 = vmatpush1.msra.mxu0 0.0
  %378 = vmatprep.subr.mxu0 0.0
  %379 = vmatpush1.msra.mxu0 0.0
  %380 = vmatprep.subr.mxu0 0.0
  %381 = vmatpush1.msra.mxu0 0.0
  %382 = vmatprep.subr.mxu0 0.0
  %383 = vmatpush1.msra.mxu0 0.0
  %384 = vmatprep.subr.mxu0 0.0
  %385 = vmatpush1.msra.mxu0 0.0
  %386 = vmatprep.subr.mxu0 0.0
  %387 = vmatpush1.msra.mxu0 0.0
  %388 = vmatprep.subr.mxu0 0.0
  %389 = vmatpush1.msra.mxu0 0.0
  %390 = vmatprep.subr.mxu0 0.0
  %391 = vmatpush1.msra.mxu0 0.0
  %392 = vmatprep.mubr.f32.mxu0 0.0
  %393 = vmatmul.mubr.f32.gmra.mrb[0].mxu0 %v242
  %v394 = vpop.f32.mrb[0].mxu0
  %v395 = vadd.f32 0.0, %v394
  %v396 = vpop.f32.mrb[0].mxu0
  %v397 = vadd.f32 0.0, %v396
  %398 = vdwg.mxu0
  %v399 = vmax.f32 %v324, 0.0
  %v400 = vmax.f32 %v326, 0.0
  %v401 = vmax.f32 %v395, 0.0
  %v402 = vmax.f32 %v397, 0.0
  %s403 = scalar_lea.vmem %s1, 4
  %v404 = vld [vmem:[%s403] sm:$0xf]
  %405 = vrot.lane.b32.xlu0 %v399, 17
  %v406 = vpop.permute.xlu0 %405
  %407 = vrot.lane.b32.xlu0 %v400, 17
  %v408 = vpop.permute.xlu0 %407
  %409 = vrot.lane.b32.xlu0 %v401, 17
  %v410 = vpop.permute.xlu0 %409
  %411 = vrot.lane.b32.xlu0 %v402, 17
  %v412 = vpop.permute.xlu0 %411
  %v413 = vsel %vm55, %v410, %v412
  %v414 = vsel %vm55, %v408, %v410
  %v415 = vsel %vm55, %v406, %v408
  %v416 = vsel %vm55, %v412, %v406
  %417 = vrot.lane.b32.xlu0 %v399, 16
  %v418 = vpop.permute.xlu0 %417
  %419 = vrot.lane.b32.xlu0 %v400, 16
  %v420 = vpop.permute.xlu0 %419
  %421 = vrot.lane.b32.xlu0 %v401, 16
  %v422 = vpop.permute.xlu0 %421
  %423 = vrot.lane.b32.xlu0 %v402, 16
  %v424 = vpop.permute.xlu0 %423
  %v425 = vsel %vm68, %v422, %v424
  %v426 = vsel %vm68, %v420, %v422
  %v427 = vsel %vm68, %v418, %v420
  %v428 = vsel %vm68, %v424, %v418
  %429 = vrot.lane.b32.xlu0 %v399, 15
  %v430 = vpop.permute.xlu0 %429
  %431 = vrot.lane.b32.xlu0 %v400, 15
  %v432 = vpop.permute.xlu0 %431
  %433 = vrot.lane.b32.xlu0 %v401, 15
  %v434 = vpop.permute.xlu0 %433
  %435 = vrot.lane.b32.xlu0 %v402, 15
  %v436 = vpop.permute.xlu0 %435
  %v437 = vsel %vm81, %v434, %v436
  %v438 = vsel %vm81, %v432, %v434
  %v439 = vsel %vm81, %v430, %v432
  %v440 = vsel %vm81, %v436, %v430
  %441 = vrot.lane.b32.xlu0 %v399, 1
  %v442 = vpop.permute.xlu0 %441
  %443 = vrot.lane.b32.xlu0 %v400, 1
  %v444 = vpop.permute.xlu0 %443
  %445 = vrot.lane.b32.xlu0 %v401, 1
  %v446 = vpop.permute.xlu0 %445
  %447 = vrot.lane.b32.xlu0 %v402, 1
  %v448 = vpop.permute.xlu0 %447
  %v449 = vsel %vm94, %v446, %v448
  %v450 = vsel %vm94, %v444, %v446
  %v451 = vsel %vm94, %v442, %v444
  %v452 = vsel %vm94, %v448, %v442
  %453 = vrot.lane.b32.xlu0 %v399, 127
  %v454 = vpop.permute.xlu0 %453
  %455 = vrot.lane.b32.xlu0 %v400, 127
  %v456 = vpop.permute.xlu0 %455
  %457 = vrot.lane.b32.xlu0 %v401, 127
  %v458 = vpop.permute.xlu0 %457
  %459 = vrot.lane.b32.xlu0 %v402, 127
  %v460 = vpop.permute.xlu0 %459
  %v461 = vsel %vm107, %v458, %v460
  %v462 = vsel %vm107, %v456, %v458
  %v463 = vsel %vm107, %v454, %v456
  %v464 = vsel %vm107, %v460, %v454
  %465 = vrot.lane.b32.xlu0 %v399, 113
  %v466 = vpop.permute.xlu0 %465
  %467 = vrot.lane.b32.xlu0 %v400, 113
  %v468 = vpop.permute.xlu0 %467
  %469 = vrot.lane.b32.xlu0 %v401, 113
  %v470 = vpop.permute.xlu0 %469
  %471 = vrot.lane.b32.xlu0 %v402, 113
  %v472 = vpop.permute.xlu0 %471
  %v473 = vsel %vm120, %v470, %v472
  %v474 = vsel %vm120, %v468, %v470
  %v475 = vsel %vm120, %v466, %v468
  %v476 = vsel %vm120, %v472, %v466
  %477 = vrot.lane.b32.xlu0 %v399, 112
  %v478 = vpop.permute.xlu0 %477
  %479 = vrot.lane.b32.xlu0 %v400, 112
  %v480 = vpop.permute.xlu0 %479
  %481 = vrot.lane.b32.xlu0 %v401, 112
  %v482 = vpop.permute.xlu0 %481
  %483 = vrot.lane.b32.xlu0 %v402, 112
  %v484 = vpop.permute.xlu0 %483
  %v485 = vsel %vm133, %v482, %v484
  %v486 = vsel %vm133, %v480, %v482
  %v487 = vsel %vm133, %v478, %v480
  %v488 = vsel %vm133, %v484, %v478
  %489 = vrot.lane.b32.xlu0 %v399, 111
  %v490 = vpop.permute.xlu0 %489
  %491 = vrot.lane.b32.xlu0 %v400, 111
  %v492 = vpop.permute.xlu0 %491
  %493 = vrot.lane.b32.xlu0 %v401, 111
  %v494 = vpop.permute.xlu0 %493
  %495 = vrot.lane.b32.xlu0 %v402, 111
  %v496 = vpop.permute.xlu0 %495
  %v497 = vsel %vm146, %v494, %v496
  %v498 = vsel %vm146, %v492, %v494
  %v499 = vsel %vm146, %v490, %v492
  %v500 = vsel %vm146, %v496, %v490
  %v505 = vrot.slane %v428, 4
  %v506 = vrot.slane %v427, 4
  %v507 = vrot.slane %v426, 4
  %v508 = vrot.slane %v425, 4
  %v517 = vrot.slane %v452, 4
  %v518 = vrot.slane %v451, 4
  %v519 = vrot.slane %v450, 4
  %v520 = vrot.slane %v449, 4
  %v529 = vrot.slane %v463, 4
  %v530 = vrot.slane %v462, 4
  %v531 = vrot.slane %v461, 4
  %v532 = vrot.slane %v464, 4
  %v541 = vrot.slane %v487, 4
  %v542 = vrot.slane %v486, 4
  %v543 = vrot.slane %v485, 4
  %v544 = vrot.slane %v488, 4
  %v549 = vsel %vm199, %v416, %v505
  %v550 = vsel %vm199, %v415, %v506
  %v551 = vsel %vm199, %v414, %v507
  %v552 = vsel %vm199, %v413, %v508
  %v553 = vsel %vm199, %v440, %v517
  %v554 = vsel %vm199, %v439, %v518
  %v555 = vsel %vm199, %v438, %v519
  %v556 = vsel %vm199, %v437, %v520
  %v557 = vsel %vm199, %v399, %v529
  %v558 = vsel %vm199, %v400, %v530
  %v559 = vsel %vm199, %v401, %v531
  %v560 = vsel %vm199, %v402, %v532
  %v561 = vsel %vm199, %v475, %v541
  %v562 = vsel %vm199, %v474, %v542
  %v563 = vsel %vm199, %v473, %v543
  %v564 = vsel %vm199, %v476, %v544
  %v565 = vsel %vm199, %v499, 1.0
  %v566 = vsel %vm199, %v498, 1.0
  %v567 = vsel %vm199, %v497, 1.0
  %v568 = vsel %vm199, %v500, 1.0
  %v569 = vmul.f32 %v549, %v16
  %v570 = vmul.f32 %v550, %v17
  %v571 = vmul.f32 %v551, %v18
  %v572 = vmul.f32 %v552, %v19
  %v573 = vmul.f32 %v553, %v20
  %v574 = vmul.f32 %v554, %v21
  %v575 = vmul.f32 %v555, %v22
  %v576 = vmul.f32 %v556, %v23
  %v577 = vmul.f32 %v557, %v24
  %v578 = vmul.f32 %v558, %v25
  %v579 = vmul.f32 %v559, %v26
  %v580 = vmul.f32 %v560, %v27
  %v581 = vmul.f32 %v561, %v28
  %v582 = vmul.f32 %v562, %v29
  %v583 = vmul.f32 %v563, %v30
  %v584 = vmul.f32 %v564, %v31
  %v585 = vmul.f32 %v565, %v32
  %v586 = vmul.f32 %v566, %v33
  %v587 = vmul.f32 %v567, %v34
  %v588 = vmul.f32 %v568, %v35
  %v590 = vsel %vm240, %v404, 0
  %v593 = vsel %vm244, %v585, 0
  %v596 = vsel %vm244, %v586, 0
  %v599 = vsel %vm244, %v587, 0
  %v602 = vsel %vm244, %v588, 0
  %604 = vmatprep.subr.mxu0 %v570
  %605 = vmatpush1.msra.mxu0 %v569
  %606 = vmatprep.subr.mxu0 %v574
  %607 = vmatpush1.msra.mxu0 %v573
  %608 = vmatprep.subr.mxu0 %v578
  %609 = vmatpush1.msra.mxu0 %v577
  %610 = vmatprep.subr.mxu0 %v582
  %611 = vmatpush1.msra.mxu0 %v581
  %612 = vmatprep.subr.mxu0 %v596
  %613 = vmatpush1.msra.mxu0 %v593
  %614 = vmatprep.subr.mxu0 0.0
  %615 = vmatpush1.msra.mxu0 0.0
  %616 = vmatprep.subr.mxu0 0.0
  %617 = vmatpush1.msra.mxu0 0.0
  %618 = vmatprep.subr.mxu0 0.0
  %619 = vmatpush1.msra.mxu0 0.0
  %620 = vmatprep.subr.mxu0 0.0
  %621 = vmatpush1.msra.mxu0 0.0
  %622 = vmatprep.subr.mxu0 0.0
  %623 = vmatpush1.msra.mxu0 0.0
  %624 = vmatprep.subr.mxu0 0.0
  %625 = vmatpush1.msra.mxu0 0.0
  %626 = vmatprep.subr.mxu0 0.0
  %627 = vmatpush1.msra.mxu0 0.0
  %628 = vmatprep.subr.mxu0 0.0
  %629 = vmatpush1.msra.mxu0 0.0
  %630 = vmatprep.subr.mxu0 0.0
  %631 = vmatpush1.msra.mxu0 0.0
  %632 = vmatprep.subr.mxu0 0.0
  %633 = vmatpush1.msra.mxu0 0.0
  %634 = vmatprep.subr.mxu0 0.0
  %635 = vmatpush1.msra.mxu0 0.0
  %636 = vmatprep.subr.mxu0 0.0
  %637 = vmatpush1.msra.mxu0 0.0
  %638 = vmatprep.subr.mxu0 0.0
  %639 = vmatpush1.msra.mxu0 0.0
  %640 = vmatprep.subr.mxu0 0.0
  %641 = vmatpush1.msra.mxu0 0.0
  %642 = vmatprep.subr.mxu0 0.0
  %643 = vmatpush1.msra.mxu0 0.0
  %644 = vmatprep.subr.mxu0 0.0
  %645 = vmatpush1.msra.mxu0 0.0
  %646 = vmatprep.subr.mxu0 0.0
  %647 = vmatpush1.msra.mxu0 0.0
  %648 = vmatprep.subr.mxu0 0.0
  %649 = vmatpush1.msra.mxu0 0.0
  %650 = vmatprep.subr.mxu0 0.0
  %651 = vmatpush1.msra.mxu0 0.0
  %652 = vmatprep.subr.mxu0 0.0
  %653 = vmatpush1.msra.mxu0 0.0
  %654 = vmatprep.subr.mxu0 0.0
  %655 = vmatpush1.msra.mxu0 0.0
  %656 = vmatprep.subr.mxu0 0.0
  %657 = vmatpush1.msra.mxu0 0.0
  %658 = vmatprep.subr.mxu0 0.0
  %659 = vmatpush1.msra.mxu0 0.0
  %660 = vmatprep.subr.mxu0 0.0
  %661 = vmatpush1.msra.mxu0 0.0
  %662 = vmatprep.subr.mxu0 0.0
  %663 = vmatpush1.msra.mxu0 0.0
  %664 = vmatprep.subr.mxu0 0.0
  %665 = vmatpush1.msra.mxu0 0.0
  %666 = vmatprep.subr.mxu0 0.0
  %667 = vmatpush1.msra.mxu0 0.0
  %668 = vmatprep.mubr.f32.mxu0 0.0
  %669 = vmatmul.mubr.f32.gmra.mrb[0].mxu0 %v590
  %v670 = vpop.f32.mrb[0].mxu0
  %v671 = vadd.f32 0.0, %v670
  %v672 = vpop.f32.mrb[0].mxu0
  %v673 = vadd.f32 0.0, %v672
  %674 = vdwg.mxu0
  %675 = vmatprep.subr.mxu0 %v572
  %676 = vmatpush1.msra.mxu0 %v571
  %677 = vmatprep.subr.mxu0 %v576
  %678 = vmatpush1.msra.mxu0 %v575
  %679 = vmatprep.subr.mxu0 %v580
  %680 = vmatpush1.msra.mxu0 %v579
  %681 = vmatprep.subr.mxu0 %v584
  %682 = vmatpush1.msra.mxu0 %v583
  %683 = vmatprep.subr.mxu0 %v602
  %684 = vmatpush1.msra.mxu0 %v599
  %685 = vmatprep.subr.mxu0 0.0
  %686 = vmatpush1.msra.mxu0 0.0
  %687 = vmatprep.subr.mxu0 0.0
  %688 = vmatpush1.msra.mxu0 0.0
  %689 = vmatprep.subr.mxu0 0.0
  %690 = vmatpush1.msra.mxu0 0.0
  %691 = vmatprep.subr.mxu0 0.0
  %692 = vmatpush1.msra.mxu0 0.0
  %693 = vmatprep.subr.mxu0 0.0
  %694 = vmatpush1.msra.mxu0 0.0
  %695 = vmatprep.subr.mxu0 0.0
  %696 = vmatpush1.msra.mxu0 0.0
  %697 = vmatprep.subr.mxu0 0.0
  %698 = vmatpush1.msra.mxu0 0.0
  %699 = vmatprep.subr.mxu0 0.0
  %700 = vmatpush1.msra.mxu0 0.0
  %701 = vmatprep.subr.mxu0 0.0
  %702 = vmatpush1.msra.mxu0 0.0
  %703 = vmatprep.subr.mxu0 0.0
  %704 = vmatpush1.msra.mxu0 0.0
  %705 = vmatprep.subr.mxu0 0.0
  %706 = vmatpush1.msra.mxu0 0.0
  %707 = vmatprep.subr.mxu0 0.0
  %708 = vmatpush1.msra.mxu0 0.0
  %709 = vmatprep.subr.mxu0 0.0
  %710 = vmatpush1.msra.mxu0 0.0
  %711 = vmatprep.subr.mxu0 0.0
  %712 = vmatpush1.msra.mxu0 0.0
  %713 = vmatprep.subr.mxu0 0.0
  %714 = vmatpush1.msra.mxu0 0.0
  %715 = vmatprep.subr.mxu0 0.0
  %716 = vmatpush1.msra.mxu0 0.0
  %717 = vmatprep.subr.mxu0 0.0
  %718 = vmatpush1.msra.mxu0 0.0
  %719 = vmatprep.subr.mxu0 0.0
  %720 = vmatpush1.msra.mxu0 0.0
  %721 = vmatprep.subr.mxu0 0.0
  %722 = vmatpush1.msra.mxu0 0.0
  %723 = vmatprep.subr.mxu0 0.0
  %724 = vmatpush1.msra.mxu0 0.0
  %725 = vmatprep.subr.mxu0 0.0
  %726 = vmatpush1.msra.mxu0 0.0
  %727 = vmatprep.subr.mxu0 0.0
  %728 = vmatpush1.msra.mxu0 0.0
  %729 = vmatprep.subr.mxu0 0.0
  %730 = vmatpush1.msra.mxu0 0.0
  %731 = vmatprep.subr.mxu0 0.0
  %732 = vmatpush1.msra.mxu0 0.0
  %733 = vmatprep.subr.mxu0 0.0
  %734 = vmatpush1.msra.mxu0 0.0
  %735 = vmatprep.subr.mxu0 0.0
  %736 = vmatpush1.msra.mxu0 0.0
  %737 = vmatprep.subr.mxu0 0.0
  %738 = vmatpush1.msra.mxu0 0.0
  %739 = vmatprep.mubr.f32.mxu0 0.0
  %740 = vmatmul.mubr.f32.gmra.mrb[0].mxu0 %v590
  %v741 = vpop.f32.mrb[0].mxu0
  %v742 = vadd.f32 0.0, %v741
  %v743 = vpop.f32.mrb[0].mxu0
  %v744 = vadd.f32 0.0, %v743
  %745 = vdwg.mxu0
  %v750 = vcombine.low %v671, %v673
  %v751 = vcombine.low %v742, %v744
  %v754 = vadd.f32 %v14, %v750
  %v755 = vadd.f32 %v15, %v751
  %756 = vst [vmem:[%s3] sm:$0xff] %v754
  %757 = vst [vmem:[%s3 + $0x8] sm:$0xff] %v755
  // Predicated region
  $region14: #{residual_block_nchw.1} parent=0 // pred_check
    _
  $region15: #{residual_block_nchw.1} parent=0 // pred_check_branch
    %759 = sbr.rel (0) target = $region17
  $region16: #{residual_block_nchw.1} parent=0 // pred_region
    _
  $region17: #{residual_block_nchw.1} parent=0 // pred_fallthru
    _
  // Predicated region
  $region18: #{residual_block_nchw.1} parent=0 // pred_check
    _
  $region19: #{residual_block_nchw.1} parent=0 // pred_check_branch
    %761 = sbr.rel (0) target = $region21
  $region20: #{residual_block_nchw.1} parent=0 // pred_region
    _
  $region21: #{residual_block_nchw.1} parent=0 // pred_fallthru
    _

</llo_original>
